<compile_context>
chip_gen: v6e
topology: v6e:2x2x1
jax: 0.10.0
libtpu: 0.0.40
codegen_flags: <defaults>
</compile_context>

<pallas_src>
import functools

import jax
import jax.numpy as jnp
from jax.experimental import pallas as pl
from jax.experimental.pallas import tpu as pltpu


def _round_up(x, m):
    return (x + m - 1) // m * m


def _patch_embed_kernel(x_ref, w_ref, b_ref, o_ref):
    # x_ref: (TM, Kp) bf16 patch rows (pipelined over the grid)
    # w_ref: (Kp, Ep) bf16 projection weight (VMEM-resident, constant index_map)
    # b_ref: (1, Ep)  f32 bias (resident)
    # o_ref: (TM, Ep) output tile
    acc = jnp.dot(x_ref[...], w_ref[...], preferred_element_type=jnp.float32)
    o_ref[...] = (acc + b_ref[...]).astype(o_ref.dtype)


@functools.partial(jax.jit, static_argnames=("patch_size", "tm"))
def patch_embed(x, weight, bias, patch_size, tm=1024):
    """x: (B, C, H, W); weight: (E, C, P, P) conv layout; bias: (E,).
    Returns (B, L, E) with L = (H//P)*(W//P)."""
    B, C, H, W = x.shape
    E = weight.shape[0]
    P = patch_size
    assert H % P == 0 and W % P == 0
    Hp, Wp = H // P, W // P
    L = Hp * Wp
    K = C * P * P
    M = B * L

    # ---- glue: patchify (matches Conv2d(kernel=stride=P) im2col ordering) ----
    # (B, C, Hp, P, Wp, P) -> (B, Hp, Wp, C, P, P) -> (B*L, C*P*P)
    xp = x.reshape(B, C, Hp, P, Wp, P)
    xp = jnp.transpose(xp, (0, 2, 4, 1, 3, 5))
    xp = xp.reshape(M, K)

    # conv weight (E, C, P, P) -> (C*P*P, E)
    wp = weight.reshape(E, K).T
    bp = bias.reshape(1, E).astype(jnp.float32)

    # ---- padding for lane-dense / MXU-friendly tiles ----
    Kp = _round_up(K, 128)
    Ep = _round_up(E, 128)
    TM = min(_round_up(tm, 8), _round_up(M, 8))
    Mp = _round_up(M, TM)

    xp_p = jnp.pad(xp.astype(jnp.bfloat16), ((0, Mp - M), (0, Kp - K)))
    wp_p = jnp.pad(wp.astype(jnp.bfloat16), ((0, Kp - K), (0, Ep - E)))
    bp_p = jnp.pad(bp, ((0, 0), (0, Ep - E)))

    grid = (Mp // TM,)

    out = pl.pallas_call(
        _patch_embed_kernel,
        out_shape=jax.ShapeDtypeStruct((Mp, Ep), x.dtype),
        grid_spec=pl.GridSpec(
            grid=grid,
            in_specs=[
                pl.BlockSpec((TM, Kp), lambda i: (i, 0)),   # patch rows, pipelined
                pl.BlockSpec((Kp, Ep), lambda i: (0, 0)),   # weight, resident
                pl.BlockSpec((1, Ep), lambda i: (0, 0)),    # bias, resident
            ],
            out_specs=pl.BlockSpec((TM, Ep), lambda i: (i, 0)),
        ),
        compiler_params=pltpu.CompilerParams(
            dimension_semantics=("parallel",),
        ),
        cost_estimate=pl.CostEstimate(
            flops=2 * Mp * Kp * Ep,
            transcendentals=0,
            bytes_accessed=Mp * Kp * 2 + Kp * Ep * 2 + Ep * 4 + Mp * Ep * 4,
        ),
    )(xp_p, wp_p, bp_p)

    # strip padding and restore (B, L, E)
    return out[:M, :E].reshape(B, L, E)


if __name__ == "__main__":
    # Small shapes consistent with the module: img=16, patch=4, C=4, E=32
    B, C, H, W = 2, 4, 16, 16
    P = 4
    E = 32
    L = (H // P) * (W // P)

    key = jax.random.PRNGKey(0)
    kx, kw, kb = jax.random.split(key, 3)
    x = jax.random.normal(kx, (B, C, H, W), dtype=jnp.float32)
    # deterministic synthetic params (Conv2d weight layout: (E, C, P, P))
    weight = jax.random.normal(kw, (E, C, P, P), dtype=jnp.float32) * 0.02
    bias = jax.random.normal(kb, (E,), dtype=jnp.float32) * 0.02

    out = patch_embed(x, weight, bias, P)
    out = jax.block_until_ready(out)
    assert out.shape == (B, L, E), out.shape

    # Reference 1: conv with the same bf16 operand quantization (tight check;
    # both accumulate in f32, so only summation-order noise remains).
    x_q = x.astype(jnp.bfloat16).astype(jnp.float32)
    w_q = weight.astype(jnp.bfloat16).astype(jnp.float32)
    ref = jax.lax.conv_general_dilated(
        x_q, w_q, window_strides=(P, P), padding="VALID",
        dimension_numbers=("NCHW", "OIHW", "NCHW"),
        preferred_element_type=jnp.float32)
    ref = ref + bias.reshape(1, E, 1, 1)
    ref = ref.reshape(B, E, L).transpose(0, 2, 1)
    assert jnp.allclose(out, ref, atol=1e-3, rtol=1e-3)

    # Reference 2: full-f32 conv (loose check; bounds total bf16 error).
    ref32 = jax.lax.conv_general_dilated(
        x, weight, window_strides=(P, P), padding="VALID",
        dimension_numbers=("NCHW", "OIHW", "NCHW"))
    ref32 = ref32 + bias.reshape(1, E, 1, 1)
    ref32 = ref32.reshape(B, E, L).transpose(0, 2, 1)
    assert jnp.allclose(out, ref32, atol=5e-2, rtol=5e-2)

    print("KERNEL_OK")
</pallas_src>

<mosaic_0001>
module attributes {stable_mosaic.version = 11 : i64} {
  func.func @_patch_embed_kernel(%arg0: i32, %arg1: memref<32x128xbf16, #tpu.memory_space<vmem>>, %arg2: memref<128x128xbf16, #tpu.memory_space<vmem>>, %arg3: memref<1x128xf32, #tpu.memory_space<vmem>>, %arg4: memref<32x128xf32, #tpu.memory_space<vmem>>) attributes {dimension_semantics = [#tpu.dimension_semantics<parallel>], iteration_bounds = array<i64: 1>, scalar_prefetch = 0 : i64, scratch_operands = 0 : i64, tpu.core_type = #tpu.core_type<tc>, window_params = [{transform_indices = @transform_0, window_bounds = array<i64: 32, 128>}, {pipeline_mode = #tpu.pipeline_mode<synchronous>, transform_indices = @transform_1, window_bounds = array<i64: 128, 128>}, {pipeline_mode = #tpu.pipeline_mode<synchronous>, transform_indices = @transform_2, window_bounds = array<i64: 1, 128>}, {transform_indices = @transform_3, window_bounds = array<i64: 32, 128>}]} {
    %c0 = arith.constant 0 : index
    %c0_0 = arith.constant 0 : index
    %0 = vector.load %arg1[%c0, %c0_0] : memref<32x128xbf16, #tpu.memory_space<vmem>>, vector<32x128xbf16>
    %c0_1 = arith.constant 0 : index
    %c0_2 = arith.constant 0 : index
    %1 = vector.load %arg2[%c0_1, %c0_2] : memref<128x128xbf16, #tpu.memory_space<vmem>>, vector<128x128xbf16>
    %cst = arith.constant dense<0.000000e+00> : vector<32x128xf32>
    %2 = tpu.matmul %0, %1, %cst {dimension_numbers = #tpu.dot_dimension_numbers<[1], [0], [0], [1], [0, 0, 1, 1], [], []>} : vector<32x128xbf16>, vector<128x128xbf16>, vector<32x128xf32> -> vector<32x128xf32>
    %c0_3 = arith.constant 0 : index
    %c0_4 = arith.constant 0 : index
    %3 = vector.load %arg3[%c0_3, %c0_4] : memref<1x128xf32, #tpu.memory_space<vmem>>, vector<1x128xf32>
    %4 = vector.broadcast %3 : vector<1x128xf32> to vector<32x128xf32>
    %5 = arith.addf %2, %4 : vector<32x128xf32>
    %c0_5 = arith.constant 0 : index
    %c0_6 = arith.constant 0 : index
    %6 = vector.load %arg4[%c0_5, %c0_6] : memref<32x128xf32, #tpu.memory_space<vmem>>, vector<32x128xf32>
    tpu.vector_store %arg4[%c0_5, %c0_6], %5 {strides = array<i32>} : memref<32x128xf32, #tpu.memory_space<vmem>>, vector<32x128xf32>,
    return
  }
  func.func @transform_0(%arg0: i32) -> (i32, i32) {
    %c0_i32 = arith.constant 0 : i32
    %c0_i32_0 = arith.constant 0 : i32
    return %arg0, %c0_i32 : i32, i32
  }
  func.func @transform_1(%arg0: i32) -> (i32, i32) {
    %c0_i32 = arith.constant 0 : i32
    %c0_i32_0 = arith.constant 0 : i32
    %c0_i32_1 = arith.constant 0 : i32
    return %c0_i32, %c0_i32_0 : i32, i32
  }
  func.func @transform_2(%arg0: i32) -> (i32, i32) {
    %c0_i32 = arith.constant 0 : i32
    %c0_i32_0 = arith.constant 0 : i32
    %c0_i32_1 = arith.constant 0 : i32
    return %c0_i32, %c0_i32_0 : i32, i32
  }
  func.func @transform_3(%arg0: i32) -> (i32, i32) {
    %c0_i32 = arith.constant 0 : i32
    %c0_i32_0 = arith.constant 0 : i32
    return %arg0, %c0_i32 : i32, i32
  }
}

</mosaic_0001>

<llo_original>
// kernel: patch_embed.1
$region0: #{patch_embed.1}
  #allocation0 [shape = 'u32[]', space=smem, size = 0x4, offset = 0x4, fixed_abs, tag = 'smem constant byte address 0x4 - core index']
  #allocation1 [shape = 'u32[144,128]{1,0:T(1,128)}', space=vmem, size = 0x12000, scoped, tag = 'internal scratch']
  %s0 = inlined_call_operand.vmem [shape: bf16[32,128], index: 0, kind: input, shape index: {}]
  %s1 = inlined_call_operand.vmem [shape: bf16[128,128], index: 1, kind: input, shape index: {}]
  %s2 = inlined_call_operand.vmem [shape: f32[1,128], index: 2, kind: input, shape index: {}]
  %s3 = inlined_call_operand.hbm [shape: f32[32,128], index: 3, kind: output, shape index: {}]
  %s4 = sld [smem:[#allocation0]]
  $region22: #{patch_embed.1} parent=0
    _
  %s6 = ssub.s32 1, %s4
  %s7 = scalar_select 0, %s6, %s4
  $region1: #{patch_embed.1} parent=0
    #allocation2 [shape = 'u8[16384]{0}', space=vmem, size = 0x4000, scoped, tag = 'output window, operand 0, single buffered']
    #allocation3 [shape = 's32[1]{0}', space=sflag, size = 0x4, scoped, tag = 'scoped memory for patch_embed.1']
    %8 = vsyncpa [#allocation3], 0
    // Predicated region
    $region2: #{patch_embed.1} parent=1 // pred_check
      _
    $region3: #{patch_embed.1} parent=1 // pred_check_branch
      %10 = sbr.rel (0) target = $region5
    $region4: #{patch_embed.1} parent=1 // pred_region
      _
    $region5: #{patch_embed.1} parent=1 // pred_fallthru
      _
    // Predicated region
    $region6: #{patch_embed.1} parent=1 // pred_check
      _
    $region7: #{patch_embed.1} parent=1 // pred_check_branch
      %12 = sbr.rel (0) target = $region9
    $region8: #{patch_embed.1} parent=1 // pred_region
      _
    $region9: #{patch_embed.1} parent=1 // pred_fallthru
      _
    // Predicated region
    $region10: #{patch_embed.1} parent=1 // pred_check
      _
    $region11: #{patch_embed.1} parent=1 // pred_check_branch
      %14 = sbr.rel (0) target = $region13
    $region12: #{patch_embed.1} parent=1 // pred_region
      _
    $region13: #{patch_embed.1} parent=1 // pred_fallthru
      _
    %v16 = vld [vmem:[%s0] sm:$0xf]
    %v17 = vld [vmem:[%s0 + $0x4] sm:$0xf]
    %v18 = vld [vmem:[%s0 + $0x8] sm:$0xf]
    %v19 = vld [vmem:[%s0 + $0xc] sm:$0xf]
    %v20 = vld [vmem:[%s1] sm:$0xf]
    %v21 = vld [vmem:[%s1 + $0x4] sm:$0xf]
    %v22 = vld [vmem:[%s1 + $0x8] sm:$0xf]
    %v23 = vld [vmem:[%s1 + $0xc] sm:$0xf]
    %v24 = vld [vmem:[%s1 + $0x10] sm:$0xf]
    %v25 = vld [vmem:[%s1 + $0x14] sm:$0xf]
    %v26 = vld [vmem:[%s1 + $0x18] sm:$0xf]
    %v27 = vld [vmem:[%s1 + $0x1c] sm:$0xf]
    %v28 = vld [vmem:[%s1 + $0x20] sm:$0xf]
    %v29 = vld [vmem:[%s1 + $0x24] sm:$0xf]
    %v30 = vld [vmem:[%s1 + $0x28] sm:$0xf]
    %v31 = vld [vmem:[%s1 + $0x2c] sm:$0xf]
    %v32 = vld [vmem:[%s1 + $0x30] sm:$0xf]
    %v33 = vld [vmem:[%s1 + $0x34] sm:$0xf]
    %v34 = vld [vmem:[%s1 + $0x38] sm:$0xf]
    %v35 = vld [vmem:[%s1 + $0x3c] sm:$0xf]
    %v36 = vld [vmem:[%s2] sm:$0x1]
    %v38 = vlaneseq
    %v39 = vshrl.u32 %v38, 7
    %v40 = vsub.s32 0, %v39
    %v41 = vrot.slane %v36, %v40
    %v47 = vunpack.c.l.b16 %v16
    %v48 = vunpack.c.l.b16 %v17
    %v49 = vunpack.c.l.b16 %v18
    %v50 = vunpack.c.l.b16 %v19
    %v51 = vpack.c.b16 %v48, %v47
    %v52 = vpack.c.b16 %v50, %v49
    %v71 = vunpack.c.l.b16 %v20
    %v72 = vunpack.c.l.b16 %v21
    %v73 = vunpack.c.l.b16 %v22
    %v74 = vunpack.c.l.b16 %v23
    %v75 = vunpack.c.l.b16 %v24
    %v76 = vunpack.c.l.b16 %v25
    %v77 = vunpack.c.l.b16 %v26
    %v78 = vunpack.c.l.b16 %v27
    %v79 = vunpack.c.l.b16 %v28
    %v80 = vunpack.c.l.b16 %v29
    %v81 = vunpack.c.l.b16 %v30
    %v82 = vunpack.c.l.b16 %v31
    %v83 = vunpack.c.l.b16 %v32
    %v84 = vunpack.c.l.b16 %v33
    %v85 = vunpack.c.l.b16 %v34
    %v86 = vunpack.c.l.b16 %v35
    %v87 = vpack.c.b16 %v72, %v71
    %v88 = vpack.c.b16 %v74, %v73
    %v89 = vpack.c.b16 %v76, %v75
    %v90 = vpack.c.b16 %v78, %v77
    %v91 = vpack.c.b16 %v80, %v79
    %v92 = vpack.c.b16 %v82, %v81
    %v93 = vpack.c.b16 %v84, %v83
    %v94 = vpack.c.b16 %v86, %v85
    %103 = vmatprep.subr.bf16.mxu0 0
    %104 = vmatpush1.bf16.msra.mxu0 %v94
    %105 = vmatprep.subr.bf16.mxu0 0
    %106 = vmatpush1.bf16.msra.mxu0 %v93
    %107 = vmatprep.subr.bf16.mxu0 0
    %108 = vmatpush1.bf16.msra.mxu0 %v92
    %109 = vmatprep.subr.bf16.mxu0 0
    %110 = vmatpush1.bf16.msra.mxu0 %v91
    %111 = vmatprep.subr.bf16.mxu0 0
    %112 = vmatpush1.bf16.msra.mxu0 %v90
    %113 = vmatprep.subr.bf16.mxu0 0
    %114 = vmatpush1.bf16.msra.mxu0 %v89
    %115 = vmatprep.subr.bf16.mxu0 0
    %116 = vmatpush1.bf16.msra.mxu0 %v88
    %117 = vmatprep.subr.bf16.mxu0 0
    %118 = vmatpush1.bf16.msra.mxu0 %v87
    %119 = vmatprep.subr.bf16.mxu0 0
    %120 = vmatpush2.bf16.msra.mxu0 0
    %121 = vmatprep.subr.bf16.mxu0 0
    %122 = vmatpush2.bf16.msra.mxu0 0
    %123 = vmatprep.subr.bf16.mxu0 0
    %124 = vmatpush2.bf16.msra.mxu0 0
    %125 = vmatprep.subr.bf16.mxu0 0
    %126 = vmatpush2.bf16.msra.mxu0 0
    %127 = vmatprep.subr.bf16.mxu0 0
    %128 = vmatpush2.bf16.msra.mxu0 0
    %129 = vmatprep.subr.bf16.mxu0 0
    %130 = vmatpush2.bf16.msra.mxu0 0
    %131 = vmatprep.subr.bf16.mxu0 0
    %132 = vmatpush2.bf16.msra.mxu0 0
    %133 = vmatprep.subr.bf16.mxu0 0
    %134 = vmatpush2.bf16.msra.mxu0 0
    %135 = vmatprep.mubr.bf16.mxu0 0
    %136 = vmatmul.mubr.bf16.gmra.mxu0 %v51
    %v137 = vpop.f32.mrf.mxu0
    %v138 = vadd.f32 %v41, %v137
    %v139 = vpop.f32.mrf.mxu0
    %v140 = vpop.f32.mrf.mxu0
    %v141 = vadd.f32 %v41, %v140
    %v142 = vpop.f32.mrf.mxu0
    %143 = vmatprep.mubr.bf16.mxu0 0
    %144 = vmatmul.mubr.bf16.gmra.mxu0 %v52
    %v145 = vpop.f32.mrf.mxu0
    %v146 = vadd.f32 %v41, %v145
    %v147 = vpop.f32.mrf.mxu0
    %v148 = vpop.f32.mrf.mxu0
    %v149 = vadd.f32 %v41, %v148
    %v150 = vpop.f32.mrf.mxu0
    %151 = vdwg.mxu0
    %152 = vst [vmem:[#allocation2] sm:$0xff] %v138
    %153 = vst [vmem:[#allocation2 + $0x8] sm:$0xff] %v141
    %154 = vst [vmem:[#allocation2 + $0x10] sm:$0xff] %v146
    %155 = vst [vmem:[#allocation2 + $0x18] sm:$0xff] %v149
    // Predicated region
    $region14: #{patch_embed.1} parent=1 // pred_check
      _
    $region15: #{patch_embed.1} parent=1 // pred_check_branch
      %157 = sbr.rel (0) target = $region17
    $region16: #{patch_embed.1} parent=1 // pred_region
      %s159 = ssub.s32 512, 512
      %160 = vsyncadd [#allocation3], %s159
      %s161 = sshll.u32 [#allocation2], 4
      %s162 = int_to_ptr.vmem [resolvable:$true] %s161
      %167 = dma.vmem_to_hbm [thread:$0]  %s162, 512, %s3, [#allocation3], 128, 128, 8
    $region17: #{patch_embed.1} parent=1 // pred_fallthru
      _
    // Predicated region
    $region18: #{patch_embed.1} parent=1 // pred_check
      _
    $region19: #{patch_embed.1} parent=1 // pred_check_branch
      %169 = sbr.rel (0) target = $region21
    $region20: #{patch_embed.1} parent=1 // pred_region
      %170 = dma.done [#allocation3], 512
    $region21: #{patch_embed.1} parent=1 // pred_fallthru
      _
    %171 = vsyncpa [#allocation3], 1

</llo_original>
